<compile_context>
chip_gen: v7x
topology: tpu7x:2x2x1
jax: 0.10.0
libtpu: 0.0.40
codegen_flags: <defaults>
</compile_context>

<pallas_src>
import jax
import jax.numpy as jnp
from jax.experimental import pallas as pl
from jax.experimental.pallas import tpu as pltpu

INPUT_FEATURES = 70
K_PAD = 128                       # layer-1 K padded to a full lane width
HIDDEN_LAYERS = (256, 128, 64)
NUM_HEADS = 5                     # short, medium, long, volatility, confidence
BN_EPS = 1e-5
TM_MAX = 512                      # batch tile cap (multiple of 128; VMEM-safe on v7x)


def _round_up(n, m):
    return ((n + m - 1) // m) * m


def _mlp_kernel(x_ref,
                w1_ref, b1_ref,
                w2_ref, b2_ref,
                w3_ref, b3_ref,
                wh_ref, bh_ref,
                out_ref):
    """Fused MLP: 3x (Linear[+folded BN] -> ReLU) -> 5 packed heads -> sigmoid."""
    h = x_ref[...]                                        # bf16 (tm, 128)

    def block(h, w_ref, b_ref):
        z = jnp.dot(h, w_ref[...], preferred_element_type=jnp.float32)  # MXU, f32 acc
        z = z + b_ref[...]                                # f32 bias (BN folded in)
        return jnp.maximum(z, 0.0).astype(jnp.bfloat16)   # f32 ReLU, bf16 for next MXU

    h = block(h, w1_ref, b1_ref)                          # (tm, 256)
    h = block(h, w2_ref, b2_ref)                          # (tm, 128)
    h = block(h, w3_ref, b3_ref)                          # (tm, 64)

    logits = jnp.dot(h, wh_ref[...], preferred_element_type=jnp.float32)
    logits = logits + bh_ref[...]                         # (tm, 5)
    out_ref[...] = jax.nn.sigmoid(logits).astype(out_ref.dtype)


def init_params(key):
    """Deterministic synthetic parameters (shapes match the PyTorch module)."""
    params = {}
    sizes = (INPUT_FEATURES,) + HIDDEN_LAYERS
    keys = jax.random.split(key, 2 * len(HIDDEN_LAYERS) + 2)
    k_idx = 0
    for li, (fan_in, fan_out) in enumerate(zip(sizes[:-1], sizes[1:])):
        kw, kb = keys[k_idx], keys[k_idx + 1]
        k_idx += 2
        bound = 1.0 / jnp.sqrt(float(fan_in))
        # stored as [in, out] (transposed vs. PyTorch's [out, in])
        params[f"w{li+1}"] = jax.random.uniform(
            kw, (fan_in, fan_out), jnp.float32, -bound, bound)
        params[f"b{li+1}"] = jax.random.uniform(
            kb, (1, fan_out), jnp.float32, -bound, bound)
        # BatchNorm1d defaults: gamma=1, beta=0, running_mean=0, running_var=1
        params[f"g{li+1}"] = jnp.ones((1, fan_out), jnp.float32)
        params[f"be{li+1}"] = jnp.zeros((1, fan_out), jnp.float32)
        params[f"m{li+1}"] = jnp.zeros((1, fan_out), jnp.float32)
        params[f"v{li+1}"] = jnp.ones((1, fan_out), jnp.float32)
    # Five (64 -> 1) heads packed into one (64, 5) matrix / (1, 5) bias.
    kwh, kbh = keys[k_idx], keys[k_idx + 1]
    bound = 1.0 / jnp.sqrt(float(sizes[-1]))
    params["wh"] = jax.random.uniform(
        kwh, (sizes[-1], NUM_HEADS), jnp.float32, -bound, bound)
    params["bh"] = jax.random.uniform(
        kbh, (1, NUM_HEADS), jnp.float32, -bound, bound)
    return params


def fold_params(params):
    """Fold eval-mode BN into the Linear, pad layer-1 K to 128, cast MXU
    operands to bf16 (biases stay f32).  Do this once, outside the hot path."""
    fused = {}
    for li in range(1, len(HIDDEN_LAYERS) + 1):
        s = params[f"g{li}"] * jax.lax.rsqrt(params[f"v{li}"] + BN_EPS)   # (1, H)
        w = params[f"w{li}"] * s                                           # (in, H)
        b = (params[f"b{li}"] - params[f"m{li}"]) * s + params[f"be{li}"]  # (1, H)
        if li == 1:
            w = jnp.pad(w, ((0, K_PAD - INPUT_FEATURES), (0, 0)))
        fused[f"w{li}"] = w.astype(jnp.bfloat16)
        fused[f"b{li}"] = b.astype(jnp.float32)
    fused["wh"] = params["wh"].astype(jnp.bfloat16)
    fused["bh"] = params["bh"].astype(jnp.float32)
    return fused


@jax.jit
def _forward(x, fused):
    """x: (batch, 70) f32 -> (batch, 5) f32 sigmoid outputs."""
    batch = x.shape[0]
    h1, h2, h3 = HIDDEN_LAYERS

    # Batch tile: for small batch the tile == padded batch (grid of 1, block ==
    # full array dims); for large batch a fixed 512-row tile pipelines and
    # bounds VMEM on every generation (incl. v7x's 64 MiB).
    tm = min(TM_MAX, _round_up(batch, 16))
    b_pad = _round_up(batch, tm)

    xp = jnp.pad(x.astype(jnp.bfloat16),
                 ((0, b_pad - batch), (0, K_PAD - INPUT_FEATURES)))

    ordered = [
        xp,
        fused["w1"], fused["b1"],
        fused["w2"], fused["b2"],
        fused["w3"], fused["b3"],
        fused["wh"], fused["bh"],
    ]

    def resident(shape):
        # Constant index map -> weights stay VMEM-resident across batch tiles.
        return pl.BlockSpec(shape, lambda i: (0, 0))

    in_specs = [
        pl.BlockSpec((tm, K_PAD), lambda i: (i, 0)),       # x tile follows grid
        resident((K_PAD, h1)), resident((1, h1)),
        resident((h1, h2)), resident((1, h2)),
        resident((h2, h3)), resident((1, h3)),
        resident((h3, NUM_HEADS)), resident((1, NUM_HEADS)),
    ]

    flops = 2 * b_pad * (K_PAD * h1 + h1 * h2 + h2 * h3 + h3 * NUM_HEADS)
    param_bytes = sum(int(a.size) * a.dtype.itemsize for a in ordered[1:])
    bytes_accessed = param_bytes + int(xp.size) * 2 + b_pad * NUM_HEADS * 4

    out = pl.pallas_call(
        _mlp_kernel,
        grid=(b_pad // tm,),
        in_specs=in_specs,
        out_specs=pl.BlockSpec((tm, NUM_HEADS), lambda i: (i, 0)),
        out_shape=jax.ShapeDtypeStruct((b_pad, NUM_HEADS), jnp.float32),
        compiler_params=pltpu.CompilerParams(
            dimension_semantics=("parallel",)),      # shards across TCs on v7x
        cost_estimate=pl.CostEstimate(
            flops=flops,
            transcendentals=b_pad * NUM_HEADS,
            bytes_accessed=bytes_accessed),
    )(*ordered)
    return out[:batch]


def coin_potential_predictor(x, fused_params):
    """Returns (short_term, medium_term, long_term, volatility, confidence),
    each (batch, 1), matching the PyTorch module's outputs."""
    out = _forward(x, fused_params)                       # single (B, 5) array from jit
    return (out[:, 0:1], out[:, 1:2], out[:, 2:3], out[:, 3:4], out[:, 4:5])


def _reference_fused_bf16(x, fused):
    """Pure-JAX mirror of the kernel's bf16/f32 arithmetic (tight check)."""
    h = jnp.pad(x, ((0, 0), (0, K_PAD - INPUT_FEATURES))).astype(jnp.bfloat16)
    for li in range(1, len(HIDDEN_LAYERS) + 1):
        z = jnp.dot(h, fused[f"w{li}"], preferred_element_type=jnp.float32)
        h = jnp.maximum(z + fused[f"b{li}"], 0.0).astype(jnp.bfloat16)
    logits = jnp.dot(h, fused["wh"], preferred_element_type=jnp.float32) + fused["bh"]
    return jax.nn.sigmoid(logits)


def _reference_f32(x, params):
    """Full-precision, un-folded reference (loose semantic check)."""
    h = x
    for li in range(1, len(HIDDEN_LAYERS) + 1):
        h = h @ params[f"w{li}"] + params[f"b{li}"]
        h = (h - params[f"m{li}"]) * jax.lax.rsqrt(
            params[f"v{li}"] + BN_EPS) * params[f"g{li}"] + params[f"be{li}"]
        h = jnp.maximum(h, 0.0)
    return jax.nn.sigmoid(h @ params["wh"] + params["bh"])


if __name__ == "__main__":
    key = jax.random.PRNGKey(0)
    k_params, k_x = jax.random.split(key)
    params = init_params(k_params)
    fused = fold_params(params)          # one-time BN fold / pad / bf16 cast

    batch = 8
    x = jax.random.normal(k_x, (batch, INPUT_FEATURES), jnp.float32)

    outs = coin_potential_predictor(x, fused)
    outs = jax.block_until_ready(outs)

    got = jnp.concatenate(outs, axis=-1)
    assert got.shape == (batch, NUM_HEADS)

    # Tight check vs. a reference that mirrors the kernel arithmetic exactly.
    ref_bf16 = _reference_fused_bf16(x, fused)
    assert jnp.allclose(got, ref_bf16, atol=2e-3, rtol=2e-3), \
        "mismatch vs bf16 reference"
    # Loose check vs. the full-precision, un-folded (Linear->BN->ReLU) math.
    ref_f32 = _reference_f32(x, params)
    assert jnp.allclose(got, ref_f32, atol=3e-2, rtol=3e-2), \
        "mismatch vs f32 reference"

    print("KERNEL_OK")
</pallas_src>

<mosaic_0001>
module attributes {stable_mosaic.version = 11 : i64} {
  func.func @_mlp_kernel(%arg0: i32, %arg1: memref<16x128xbf16, #tpu.memory_space<vmem>>, %arg2: memref<128x256xbf16, #tpu.memory_space<vmem>>, %arg3: memref<1x256xf32, #tpu.memory_space<vmem>>, %arg4: memref<256x128xbf16, #tpu.memory_space<vmem>>, %arg5: memref<1x128xf32, #tpu.memory_space<vmem>>, %arg6: memref<128x64xbf16, #tpu.memory_space<vmem>>, %arg7: memref<1x64xf32, #tpu.memory_space<vmem>>, %arg8: memref<64x5xbf16, #tpu.memory_space<vmem>>, %arg9: memref<1x5xf32, #tpu.memory_space<vmem>>, %arg10: memref<16x5xf32, #tpu.memory_space<vmem>>) attributes {dimension_semantics = [#tpu.dimension_semantics<parallel>], iteration_bounds = array<i64: 1>, scalar_prefetch = 0 : i64, scratch_operands = 0 : i64, tpu.core_type = #tpu.core_type<tc>, window_params = [{transform_indices = @transform_0, window_bounds = array<i64: 16, 128>}, {pipeline_mode = #tpu.pipeline_mode<synchronous>, transform_indices = @transform_1, window_bounds = array<i64: 128, 256>}, {pipeline_mode = #tpu.pipeline_mode<synchronous>, transform_indices = @transform_2, window_bounds = array<i64: 1, 256>}, {pipeline_mode = #tpu.pipeline_mode<synchronous>, transform_indices = @transform_3, window_bounds = array<i64: 256, 128>}, {pipeline_mode = #tpu.pipeline_mode<synchronous>, transform_indices = @transform_4, window_bounds = array<i64: 1, 128>}, {pipeline_mode = #tpu.pipeline_mode<synchronous>, transform_indices = @transform_5, window_bounds = array<i64: 128, 64>}, {pipeline_mode = #tpu.pipeline_mode<synchronous>, transform_indices = @transform_6, window_bounds = array<i64: 1, 64>}, {pipeline_mode = #tpu.pipeline_mode<synchronous>, transform_indices = @transform_7, window_bounds = array<i64: 64, 5>}, {pipeline_mode = #tpu.pipeline_mode<synchronous>, transform_indices = @transform_8, window_bounds = array<i64: 1, 5>}, {transform_indices = @transform_9, window_bounds = array<i64: 16, 5>}]} {
    %c0 = arith.constant 0 : index
    %c0_0 = arith.constant 0 : index
    %0 = vector.load %arg1[%c0, %c0_0] : memref<16x128xbf16, #tpu.memory_space<vmem>>, vector<16x128xbf16>
    %c0_1 = arith.constant 0 : index
    %c0_2 = arith.constant 0 : index
    %1 = vector.load %arg2[%c0_1, %c0_2] : memref<128x256xbf16, #tpu.memory_space<vmem>>, vector<128x256xbf16>
    %cst = arith.constant dense<0.000000e+00> : vector<16x256xf32>
    %2 = tpu.matmul %0, %1, %cst {dimension_numbers = #tpu.dot_dimension_numbers<[1], [0], [0], [1], [0, 0, 1, 1], [], []>} : vector<16x128xbf16>, vector<128x256xbf16>, vector<16x256xf32> -> vector<16x256xf32>
    %c0_3 = arith.constant 0 : index
    %c0_4 = arith.constant 0 : index
    %3 = vector.load %arg3[%c0_3, %c0_4] : memref<1x256xf32, #tpu.memory_space<vmem>>, vector<1x256xf32>
    %4 = vector.broadcast %3 : vector<1x256xf32> to vector<16x256xf32>
    %5 = arith.addf %2, %4 : vector<16x256xf32>
    %cst_5 = arith.constant 0.000000e+00 : f32
    %6 = vector.broadcast %cst_5 : f32 to vector<16x256xf32>
    %7 = arith.maximumf %5, %6 : vector<16x256xf32>
    %8 = arith.truncf %7 : vector<16x256xf32> to vector<16x256xbf16>
    %c0_6 = arith.constant 0 : index
    %c0_7 = arith.constant 0 : index
    %9 = vector.load %arg4[%c0_6, %c0_7] : memref<256x128xbf16, #tpu.memory_space<vmem>>, vector<256x128xbf16>
    %cst_8 = arith.constant dense<0.000000e+00> : vector<16x128xf32>
    %10 = tpu.matmul %8, %9, %cst_8 {dimension_numbers = #tpu.dot_dimension_numbers<[1], [0], [0], [1], [0, 0, 1, 1], [], []>} : vector<16x256xbf16>, vector<256x128xbf16>, vector<16x128xf32> -> vector<16x128xf32>
    %c0_9 = arith.constant 0 : index
    %c0_10 = arith.constant 0 : index
    %11 = vector.load %arg5[%c0_9, %c0_10] : memref<1x128xf32, #tpu.memory_space<vmem>>, vector<1x128xf32>
    %12 = vector.broadcast %11 : vector<1x128xf32> to vector<16x128xf32>
    %13 = arith.addf %10, %12 : vector<16x128xf32>
    %cst_11 = arith.constant 0.000000e+00 : f32
    %14 = vector.broadcast %cst_11 : f32 to vector<16x128xf32>
    %15 = arith.maximumf %13, %14 : vector<16x128xf32>
    %16 = arith.truncf %15 : vector<16x128xf32> to vector<16x128xbf16>
    %c0_12 = arith.constant 0 : index
    %c0_13 = arith.constant 0 : index
    %17 = vector.load %arg6[%c0_12, %c0_13] : memref<128x64xbf16, #tpu.memory_space<vmem>>, vector<128x64xbf16>
    %cst_14 = arith.constant dense<0.000000e+00> : vector<16x64xf32>
    %18 = tpu.matmul %16, %17, %cst_14 {dimension_numbers = #tpu.dot_dimension_numbers<[1], [0], [0], [1], [0, 0, 1, 1], [], []>} : vector<16x128xbf16>, vector<128x64xbf16>, vector<16x64xf32> -> vector<16x64xf32>
    %c0_15 = arith.constant 0 : index
    %c0_16 = arith.constant 0 : index
    %19 = vector.load %arg7[%c0_15, %c0_16] : memref<1x64xf32, #tpu.memory_space<vmem>>, vector<1x64xf32>
    %20 = vector.broadcast %19 : vector<1x64xf32> to vector<16x64xf32>
    %21 = arith.addf %18, %20 : vector<16x64xf32>
    %cst_17 = arith.constant 0.000000e+00 : f32
    %22 = vector.broadcast %cst_17 : f32 to vector<16x64xf32>
    %23 = arith.maximumf %21, %22 : vector<16x64xf32>
    %24 = arith.truncf %23 : vector<16x64xf32> to vector<16x64xbf16>
    %c0_18 = arith.constant 0 : index
    %c0_19 = arith.constant 0 : index
    %25 = vector.load %arg8[%c0_18, %c0_19] : memref<64x5xbf16, #tpu.memory_space<vmem>>, vector<64x5xbf16>
    %cst_20 = arith.constant dense<0.000000e+00> : vector<16x5xf32>
    %26 = tpu.matmul %24, %25, %cst_20 {dimension_numbers = #tpu.dot_dimension_numbers<[1], [0], [0], [1], [0, 0, 1, 1], [], []>} : vector<16x64xbf16>, vector<64x5xbf16>, vector<16x5xf32> -> vector<16x5xf32>
    %c0_21 = arith.constant 0 : index
    %c0_22 = arith.constant 0 : index
    %27 = vector.load %arg9[%c0_21, %c0_22] : memref<1x5xf32, #tpu.memory_space<vmem>>, vector<1x5xf32>
    %28 = vector.broadcast %27 : vector<1x5xf32> to vector<16x5xf32>
    %29 = arith.addf %26, %28 : vector<16x5xf32>
    %30 = arith.negf %29 : vector<16x5xf32>
    %31 = math.exp %30 : vector<16x5xf32>
    %cst_23 = arith.constant 1.000000e+00 : f32
    %32 = vector.broadcast %cst_23 : f32 to vector<16x5xf32>
    %33 = arith.addf %32, %31 : vector<16x5xf32>
    %34 = arith.divf %32, %33 : vector<16x5xf32>
    %c0_24 = arith.constant 0 : index
    %c0_25 = arith.constant 0 : index
    %35 = vector.load %arg10[%c0_24, %c0_25] : memref<16x5xf32, #tpu.memory_space<vmem>>, vector<16x5xf32>
    tpu.vector_store %arg10[%c0_24, %c0_25], %34 {strides = array<i32>} : memref<16x5xf32, #tpu.memory_space<vmem>>, vector<16x5xf32>,
    return
  }
  func.func @transform_0(%arg0: i32) -> (i32, i32) {
    %c0_i32 = arith.constant 0 : i32
    %c0_i32_0 = arith.constant 0 : i32
    return %arg0, %c0_i32 : i32, i32
  }
  func.func @transform_1(%arg0: i32) -> (i32, i32) {
    %c0_i32 = arith.constant 0 : i32
    %c0_i32_0 = arith.constant 0 : i32
    %c0_i32_1 = arith.constant 0 : i32
    return %c0_i32, %c0_i32_0 : i32, i32
  }
  func.func @transform_2(%arg0: i32) -> (i32, i32) {
    %c0_i32 = arith.constant 0 : i32
    %c0_i32_0 = arith.constant 0 : i32
    %c0_i32_1 = arith.constant 0 : i32
    return %c0_i32, %c0_i32_0 : i32, i32
  }
  func.func @transform_3(%arg0: i32) -> (i32, i32) {
    %c0_i32 = arith.constant 0 : i32
    %c0_i32_0 = arith.constant 0 : i32
    %c0_i32_1 = arith.constant 0 : i32
    return %c0_i32, %c0_i32_0 : i32, i32
  }
  func.func @transform_4(%arg0: i32) -> (i32, i32) {
    %c0_i32 = arith.constant 0 : i32
    %c0_i32_0 = arith.constant 0 : i32
    %c0_i32_1 = arith.constant 0 : i32
    return %c0_i32, %c0_i32_0 : i32, i32
  }
  func.func @transform_5(%arg0: i32) -> (i32, i32) {
    %c0_i32 = arith.constant 0 : i32
    %c0_i32_0 = arith.constant 0 : i32
    %c0_i32_1 = arith.constant 0 : i32
    return %c0_i32, %c0_i32_0 : i32, i32
  }
  func.func @transform_6(%arg0: i32) -> (i32, i32) {
    %c0_i32 = arith.constant 0 : i32
    %c0_i32_0 = arith.constant 0 : i32
    %c0_i32_1 = arith.constant 0 : i32
    return %c0_i32, %c0_i32_0 : i32, i32
  }
  func.func @transform_7(%arg0: i32) -> (i32, i32) {
    %c0_i32 = arith.constant 0 : i32
    %c0_i32_0 = arith.constant 0 : i32
    %c0_i32_1 = arith.constant 0 : i32
    return %c0_i32, %c0_i32_0 : i32, i32
  }
  func.func @transform_8(%arg0: i32) -> (i32, i32) {
    %c0_i32 = arith.constant 0 : i32
    %c0_i32_0 = arith.constant 0 : i32
    %c0_i32_1 = arith.constant 0 : i32
    return %c0_i32, %c0_i32_0 : i32, i32
  }
  func.func @transform_9(%arg0: i32) -> (i32, i32) {
    %c0_i32 = arith.constant 0 : i32
    %c0_i32_0 = arith.constant 0 : i32
    return %arg0, %c0_i32 : i32, i32
  }
}

</mosaic_0001>

<llo_original>
// kernel: _forward.1
$region0: #{_forward.1}
  #allocation0 [shape = 'u32[]', space=smem, size = 0x4, offset = 0x4, fixed_abs, tag = 'smem constant byte address 0x4 - core index']
  #allocation1 [shape = 'u32[144,128]{1,0:T(1,128)}', space=vmem, size = 0x12000, scoped, tag = 'internal scratch']
  %s0 = inlined_call_operand.vmem [shape: bf16[16,128], index: 0, kind: input, shape index: {}]
  %s1 = inlined_call_operand.vmem [shape: bf16[128,256], index: 1, kind: input, shape index: {}]
  %s2 = inlined_call_operand.vmem [shape: f32[1,256], index: 2, kind: input, shape index: {}]
  %s3 = inlined_call_operand.hbm [shape: bf16[256,128], index: 3, kind: input, shape index: {}]
  %s4 = inlined_call_operand.vmem [shape: f32[1,128], index: 4, kind: input, shape index: {}]
  %s5 = inlined_call_operand.vmem [shape: bf16[128,64], index: 5, kind: input, shape index: {}]
  %s6 = inlined_call_operand.vmem [shape: f32[1,64], index: 6, kind: input, shape index: {}]
  %s7 = inlined_call_operand.vmem [shape: bf16[64,5], index: 7, kind: input, shape index: {}]
  %s8 = inlined_call_operand.vmem [shape: f32[1,5], index: 8, kind: input, shape index: {}]
  %s9 = inlined_call_operand.vmem [shape: f32[16,5], index: 9, kind: output, shape index: {}]
  %s10 = sld [smem:[#allocation0]]
  $region50: #{_forward.1} parent=0
    _
  %s12 = ssub.s32 1, %s10
  %s13 = scalar_select 0, %s12, %s10
  $region1: #{_forward.1} parent=0
    #allocation2 [shape = 'u8[65536]{0}', space=vmem, size = 0x10000, scoped, tag = 'input window, operand 3, single buffered']
    #allocation3 [shape = 's32[1]{0}', space=sflag, size = 0x4, scoped, tag = 'scoped memory for _forward.1']
    %14 = vsyncpa [#allocation3], 0
    // Predicated region
    $region2: #{_forward.1} parent=1 // pred_check
      _
    $region3: #{_forward.1} parent=1 // pred_check_branch
      %16 = sbr.rel (0) target = $region5
    $region4: #{_forward.1} parent=1 // pred_region
      _
    $region5: #{_forward.1} parent=1 // pred_fallthru
      _
    // Predicated region
    $region6: #{_forward.1} parent=1 // pred_check
      _
    $region7: #{_forward.1} parent=1 // pred_check_branch
      %18 = sbr.rel (0) target = $region9
    $region8: #{_forward.1} parent=1 // pred_region
      _
    $region9: #{_forward.1} parent=1 // pred_fallthru
      _
    // Predicated region
    $region10: #{_forward.1} parent=1 // pred_check
      _
    $region11: #{_forward.1} parent=1 // pred_check_branch
      %20 = sbr.rel (0) target = $region13
    $region12: #{_forward.1} parent=1 // pred_region
      _
    $region13: #{_forward.1} parent=1 // pred_fallthru
      _
    // Predicated region
    $region14: #{_forward.1} parent=1 // pred_check
      _
    $region15: #{_forward.1} parent=1 // pred_check_branch
      %22 = sbr.rel (0) target = $region17
    $region16: #{_forward.1} parent=1 // pred_region
      %s24 = ssub.s32 2048, 2048
      %25 = vsyncadd [#allocation3], %s24
      %s26 = sshll.u32 [#allocation2], 4
      %s27 = int_to_ptr.vmem [resolvable:$true] %s26
      %32 = dma.hbm_to_vmem [thread:$0]  %s3, 2048, %s27, [#allocation3], 64, 64, 4
    $region17: #{_forward.1} parent=1 // pred_fallthru
      _
    // Predicated region
    $region18: #{_forward.1} parent=1 // pred_check
      _
    $region19: #{_forward.1} parent=1 // pred_check_branch
      %34 = sbr.rel (0) target = $region21
    $region20: #{_forward.1} parent=1 // pred_region
      _
    $region21: #{_forward.1} parent=1 // pred_fallthru
      _
    // Predicated region
    $region22: #{_forward.1} parent=1 // pred_check
      _
    $region23: #{_forward.1} parent=1 // pred_check_branch
      %36 = sbr.rel (0) target = $region25
    $region24: #{_forward.1} parent=1 // pred_region
      _
    $region25: #{_forward.1} parent=1 // pred_fallthru
      _
    // Predicated region
    $region26: #{_forward.1} parent=1 // pred_check
      _
    $region27: #{_forward.1} parent=1 // pred_check_branch
      %38 = sbr.rel (0) target = $region29
    $region28: #{_forward.1} parent=1 // pred_region
      _
    $region29: #{_forward.1} parent=1 // pred_fallthru
      _
    // Predicated region
    $region30: #{_forward.1} parent=1 // pred_check
      _
    $region31: #{_forward.1} parent=1 // pred_check_branch
      %40 = sbr.rel (0) target = $region33
    $region32: #{_forward.1} parent=1 // pred_region
      _
    $region33: #{_forward.1} parent=1 // pred_fallthru
      _
    // Predicated region
    $region34: #{_forward.1} parent=1 // pred_check
      _
    $region35: #{_forward.1} parent=1 // pred_check_branch
      %42 = sbr.rel (0) target = $region37
    $region36: #{_forward.1} parent=1 // pred_region
      _
    $region37: #{_forward.1} parent=1 // pred_fallthru
      _
    // Predicated region
    $region38: #{_forward.1} parent=1 // pred_check
      _
    $region39: #{_forward.1} parent=1 // pred_check_branch
      %44 = sbr.rel (0) target = $region41
    $region40: #{_forward.1} parent=1 // pred_region
      %45 = dma.done [#allocation3], 2048
    $region41: #{_forward.1} parent=1 // pred_fallthru
      _
    %v47 = vld [vmem:[%s0] sm:$0xf]
    %v48 = vld [vmem:[%s0 + $0x4] sm:$0xf]
    %v49 = vld [vmem:[%s1] sm:$0xff]
    %v50 = vld [vmem:[%s1 + $0x8] sm:$0xff]
    %v51 = vld [vmem:[%s1 + $0x10] sm:$0xff]
    %v52 = vld [vmem:[%s1 + $0x18] sm:$0xff]
    %v53 = vld [vmem:[%s1 + $0x20] sm:$0xff]
    %v54 = vld [vmem:[%s1 + $0x28] sm:$0xff]
    %v55 = vld [vmem:[%s1 + $0x30] sm:$0xff]
    %v56 = vld [vmem:[%s1 + $0x38] sm:$0xff]
    %v57 = vld [vmem:[%s1 + $0x40] sm:$0xff]
    %v58 = vld [vmem:[%s1 + $0x48] sm:$0xff]
    %v59 = vld [vmem:[%s1 + $0x50] sm:$0xff]
    %v60 = vld [vmem:[%s1 + $0x58] sm:$0xff]
    %v61 = vld [vmem:[%s1 + $0x60] sm:$0xff]
    %v62 = vld [vmem:[%s1 + $0x68] sm:$0xff]
    %v63 = vld [vmem:[%s1 + $0x70] sm:$0xff]
    %v64 = vld [vmem:[%s1 + $0x78] sm:$0xff]
    %v65 = vld [vmem:[%s2] sm:$0x3]
    %v67 = vlaneseq
    %v68 = vshrl.u32 %v67, 7
    %v69 = vsub.s32 0, %v68
    %v70 = vrot.slane %v65, %v69
    %v71 = vlaneseq
    %v72 = vshrl.u32 %v71, 7
    %v73 = vsub.s32 1, %v72
    %v74 = vrot.slane %v65, %v73
    %v79 = vunpack.c.l.b16 %v47
    %v80 = vunpack.c.l.b16 %v48
    %v81 = vpack.c.b16 %v80, %v79
    %v99 = vunpack.c.l.b16 %v49
    %v100 = vunpack.c.h.b16 %v49
    %v101 = vunpack.c.l.b16 %v50
    %v102 = vunpack.c.h.b16 %v50
    %v103 = vunpack.c.l.b16 %v51
    %v104 = vunpack.c.h.b16 %v51
    %v105 = vunpack.c.l.b16 %v52
    %v106 = vunpack.c.h.b16 %v52
    %v107 = vunpack.c.l.b16 %v53
    %v108 = vunpack.c.h.b16 %v53
    %v109 = vunpack.c.l.b16 %v54
    %v110 = vunpack.c.h.b16 %v54
    %v111 = vunpack.c.l.b16 %v55
    %v112 = vunpack.c.h.b16 %v55
    %v113 = vunpack.c.l.b16 %v56
    %v114 = vunpack.c.h.b16 %v56
    %v115 = vunpack.c.l.b16 %v57
    %v116 = vunpack.c.h.b16 %v57
    %v117 = vunpack.c.l.b16 %v58
    %v118 = vunpack.c.h.b16 %v58
    %v119 = vunpack.c.l.b16 %v59
    %v120 = vunpack.c.h.b16 %v59
    %v121 = vunpack.c.l.b16 %v60
    %v122 = vunpack.c.h.b16 %v60
    %v123 = vunpack.c.l.b16 %v61
    %v124 = vunpack.c.h.b16 %v61
    %v125 = vunpack.c.l.b16 %v62
    %v126 = vunpack.c.h.b16 %v62
    %v127 = vunpack.c.l.b16 %v63
    %v128 = vunpack.c.h.b16 %v63
    %v129 = vunpack.c.l.b16 %v64
    %v130 = vunpack.c.h.b16 %v64
    %v131 = vpack.c.b16 %v101, %v99
    %v132 = vpack.c.b16 %v102, %v100
    %v133 = vpack.c.b16 %v105, %v103
    %v134 = vpack.c.b16 %v106, %v104
    %v135 = vpack.c.b16 %v109, %v107
    %v136 = vpack.c.b16 %v110, %v108
    %v137 = vpack.c.b16 %v113, %v111
    %v138 = vpack.c.b16 %v114, %v112
    %v139 = vpack.c.b16 %v117, %v115
    %v140 = vpack.c.b16 %v118, %v116
    %v141 = vpack.c.b16 %v121, %v119
    %v142 = vpack.c.b16 %v122, %v120
    %v143 = vpack.c.b16 %v125, %v123
    %v144 = vpack.c.b16 %v126, %v124
    %v145 = vpack.c.b16 %v129, %v127
    %v146 = vpack.c.b16 %v130, %v128
    %163 = vmatprep.subr.bf16.mxu0 %v132
    %164 = vmatpush1.bf16.msra.mxu0 %v131
    %165 = vmatprep.subr.bf16.mxu0 %v134
    %166 = vmatpush1.bf16.msra.mxu0 %v133
    %167 = vmatprep.subr.bf16.mxu0 %v136
    %168 = vmatpush1.bf16.msra.mxu0 %v135
    %169 = vmatprep.subr.bf16.mxu0 %v138
    %170 = vmatpush1.bf16.msra.mxu0 %v137
    %171 = vmatprep.subr.bf16.mxu0 %v140
    %172 = vmatpush1.bf16.msra.mxu0 %v139
    %173 = vmatprep.subr.bf16.mxu0 %v142
    %174 = vmatpush1.bf16.msra.mxu0 %v141
    %175 = vmatprep.subr.bf16.mxu0 %v144
    %176 = vmatpush1.bf16.msra.mxu0 %v143
    %177 = vmatprep.subr.bf16.mxu0 %v146
    %178 = vmatpush1.bf16.msra.mxu0 %v145
    %179 = vmatprep.subr.bf16.mxu0 0
    %180 = vmatpush1.bf16.msra.mxu0 0
    %181 = vmatprep.subr.bf16.mxu0 0
    %182 = vmatpush1.bf16.msra.mxu0 0
    %183 = vmatprep.subr.bf16.mxu0 0
    %184 = vmatpush1.bf16.msra.mxu0 0
    %185 = vmatprep.subr.bf16.mxu0 0
    %186 = vmatpush1.bf16.msra.mxu0 0
    %187 = vmatprep.subr.bf16.mxu0 0
    %188 = vmatpush1.bf16.msra.mxu0 0
    %189 = vmatprep.subr.bf16.mxu0 0
    %190 = vmatpush1.bf16.msra.mxu0 0
    %191 = vmatprep.subr.bf16.mxu0 0
    %192 = vmatpush1.bf16.msra.mxu0 0
    %193 = vmatprep.subr.bf16.mxu0 0
    %194 = vmatpush1.bf16.msra.mxu0 0
    %195 = vmatprep.mubr.bf16.mxu0 0
    %196 = vmatmul.mubr.bf16.gmra.mrb[0].mxu0 %v81
    %v197 = vpop.f32.mrb[0].mxu0
    %v198 = vadd.f32 %v70, %v197
    %v199 = vpop.f32.mrb[0].mxu0
    %v200 = vadd.f32 %v74, %v199
    %v201 = vpop.f32.mrb[0].mxu0
    %v202 = vadd.f32 %v70, %v201
    %v203 = vpop.f32.mrb[0].mxu0
    %v204 = vadd.f32 %v74, %v203
    %205 = vdwg.mxu0
    %v206 = vmax.f32 %v198, 0.0
    %v207 = vmax.f32 %v200, 0.0
    %v208 = vmax.f32 %v202, 0.0
    %v209 = vmax.f32 %v204, 0.0
    %v210 = vpack.c.bf16 %v208, %v206
    %v211 = vpack.c.bf16 %v209, %v207
    %v212 = vld [vmem:[#allocation2] sm:$0xf]
    %v213 = vld [vmem:[#allocation2 + $0x4] sm:$0xf]
    %v214 = vld [vmem:[#allocation2 + $0x8] sm:$0xf]
    %v215 = vld [vmem:[#allocation2 + $0xc] sm:$0xf]
    %v216 = vld [vmem:[#allocation2 + $0x10] sm:$0xf]
    %v217 = vld [vmem:[#allocation2 + $0x14] sm:$0xf]
    %v218 = vld [vmem:[#allocation2 + $0x18] sm:$0xf]
    %v219 = vld [vmem:[#allocation2 + $0x1c] sm:$0xf]
    %v220 = vld [vmem:[#allocation2 + $0x20] sm:$0xf]
    %v221 = vld [vmem:[#allocation2 + $0x24] sm:$0xf]
    %v222 = vld [vmem:[#allocation2 + $0x28] sm:$0xf]
    %v223 = vld [vmem:[#allocation2 + $0x2c] sm:$0xf]
    %v224 = vld [vmem:[#allocation2 + $0x30] sm:$0xf]
    %v225 = vld [vmem:[#allocation2 + $0x34] sm:$0xf]
    %v226 = vld [vmem:[#allocation2 + $0x38] sm:$0xf]
    %v227 = vld [vmem:[#allocation2 + $0x3c] sm:$0xf]
    %v228 = vld [vmem:[#allocation2 + $0x40] sm:$0xf]
    %v229 = vld [vmem:[#allocation2 + $0x44] sm:$0xf]
    %v230 = vld [vmem:[#allocation2 + $0x48] sm:$0xf]
    %v231 = vld [vmem:[#allocation2 + $0x4c] sm:$0xf]
    %v232 = vld [vmem:[#allocation2 + $0x50] sm:$0xf]
    %v233 = vld [vmem:[#allocation2 + $0x54] sm:$0xf]
    %v234 = vld [vmem:[#allocation2 + $0x58] sm:$0xf]
    %v235 = vld [vmem:[#allocation2 + $0x5c] sm:$0xf]
    %v236 = vld [vmem:[#allocation2 + $0x60] sm:$0xf]
    %v237 = vld [vmem:[#allocation2 + $0x64] sm:$0xf]
    %v238 = vld [vmem:[#allocation2 + $0x68] sm:$0xf]
    %v239 = vld [vmem:[#allocation2 + $0x6c] sm:$0xf]
    %v240 = vld [vmem:[#allocation2 + $0x70] sm:$0xf]
    %v241 = vld [vmem:[#allocation2 + $0x74] sm:$0xf]
    %v242 = vld [vmem:[#allocation2 + $0x78] sm:$0xf]
    %v243 = vld [vmem:[#allocation2 + $0x7c] sm:$0xf]
    %v244 = vld [vmem:[%s4] sm:$0x1]
    %v246 = vlaneseq
    %v247 = vshrl.u32 %v246, 7
    %v248 = vsub.s32 0, %v247
    %v249 = vrot.slane %v244, %v248
    %v283 = vunpack.c.l.b16 %v212
    %v284 = vunpack.c.l.b16 %v213
    %v285 = vunpack.c.l.b16 %v214
    %v286 = vunpack.c.l.b16 %v215
    %v287 = vunpack.c.l.b16 %v216
    %v288 = vunpack.c.l.b16 %v217
    %v289 = vunpack.c.l.b16 %v218
    %v290 = vunpack.c.l.b16 %v219
    %v291 = vunpack.c.l.b16 %v220
    %v292 = vunpack.c.l.b16 %v221
    %v293 = vunpack.c.l.b16 %v222
    %v294 = vunpack.c.l.b16 %v223
    %v295 = vunpack.c.l.b16 %v224
    %v296 = vunpack.c.l.b16 %v225
    %v297 = vunpack.c.l.b16 %v226
    %v298 = vunpack.c.l.b16 %v227
    %v299 = vunpack.c.l.b16 %v228
    %v300 = vunpack.c.l.b16 %v229
    %v301 = vunpack.c.l.b16 %v230
    %v302 = vunpack.c.l.b16 %v231
    %v303 = vunpack.c.l.b16 %v232
    %v304 = vunpack.c.l.b16 %v233
    %v305 = vunpack.c.l.b16 %v234
    %v306 = vunpack.c.l.b16 %v235
    %v307 = vunpack.c.l.b16 %v236
    %v308 = vunpack.c.l.b16 %v237
    %v309 = vunpack.c.l.b16 %v238
    %v310 = vunpack.c.l.b16 %v239
    %v311 = vunpack.c.l.b16 %v240
    %v312 = vunpack.c.l.b16 %v241
    %v313 = vunpack.c.l.b16 %v242
    %v314 = vunpack.c.l.b16 %v243
    %v315 = vpack.c.b16 %v284, %v283
    %v316 = vpack.c.b16 %v286, %v285
    %v317 = vpack.c.b16 %v288, %v287
    %v318 = vpack.c.b16 %v290, %v289
    %v319 = vpack.c.b16 %v292, %v291
    %v320 = vpack.c.b16 %v294, %v293
    %v321 = vpack.c.b16 %v296, %v295
    %v322 = vpack.c.b16 %v298, %v297
    %v323 = vpack.c.b16 %v300, %v299
    %v324 = vpack.c.b16 %v302, %v301
    %v325 = vpack.c.b16 %v304, %v303
    %v326 = vpack.c.b16 %v306, %v305
    %v327 = vpack.c.b16 %v308, %v307
    %v328 = vpack.c.b16 %v310, %v309
    %v329 = vpack.c.b16 %v312, %v311
    %v330 = vpack.c.b16 %v314, %v313
    %347 = vmatprep.subr.bf16.mxu0 0
    %348 = vmatpush1.bf16.msra.mxu0 %v315
    %349 = vmatprep.subr.bf16.mxu0 0
    %350 = vmatpush1.bf16.msra.mxu0 %v316
    %351 = vmatprep.subr.bf16.mxu0 0
    %352 = vmatpush1.bf16.msra.mxu0 %v317
    %353 = vmatprep.subr.bf16.mxu0 0
    %354 = vmatpush1.bf16.msra.mxu0 %v318
    %355 = vmatprep.subr.bf16.mxu0 0
    %356 = vmatpush1.bf16.msra.mxu0 %v319
    %357 = vmatprep.subr.bf16.mxu0 0
    %358 = vmatpush1.bf16.msra.mxu0 %v320
    %359 = vmatprep.subr.bf16.mxu0 0
    %360 = vmatpush1.bf16.msra.mxu0 %v321
    %361 = vmatprep.subr.bf16.mxu0 0
    %362 = vmatpush1.bf16.msra.mxu0 %v322
    %363 = vmatprep.subr.bf16.mxu0 0
    %364 = vmatpush1.bf16.msra.mxu0 %v323
    %365 = vmatprep.subr.bf16.mxu0 0
    %366 = vmatpush1.bf16.msra.mxu0 %v324
    %367 = vmatprep.subr.bf16.mxu0 0
    %368 = vmatpush1.bf16.msra.mxu0 %v325
    %369 = vmatprep.subr.bf16.mxu0 0
    %370 = vmatpush1.bf16.msra.mxu0 %v326
    %371 = vmatprep.subr.bf16.mxu0 0
    %372 = vmatpush1.bf16.msra.mxu0 %v327
    %373 = vmatprep.subr.bf16.mxu0 0
    %374 = vmatpush1.bf16.msra.mxu0 %v328
    %375 = vmatprep.subr.bf16.mxu0 0
    %376 = vmatpush1.bf16.msra.mxu0 %v329
    %377 = vmatprep.subr.bf16.mxu0 0
    %378 = vmatpush1.bf16.msra.mxu0 %v330
    %379 = vmatprep.mubr.bf16.mxu0 %v211
    %380 = vmatmul.mubr.bf16.gmra.mrb[0].mxu0 %v210
    %v381 = vpop.f32.mrb[0].mxu0
    %v382 = vadd.f32 %v249, %v381
    %v383 = vpop.f32.mrb[0].mxu0
    %v384 = vpop.f32.mrb[0].mxu0
    %v385 = vadd.f32 %v249, %v384
    %v386 = vpop.f32.mrb[0].mxu0
    %387 = vdwg.mxu0
    %v388 = vmax.f32 %v382, 0.0
    %v389 = vmax.f32 %v385, 0.0
    %v390 = vpack.c.bf16 %v389, %v388
    %v391 = vld [vmem:[%s5] sm:$0xf]
    %v392 = vld [vmem:[%s5 + $0x4] sm:$0xf]
    %v393 = vld [vmem:[%s5 + $0x8] sm:$0xf]
    %v394 = vld [vmem:[%s5 + $0xc] sm:$0xf]
    %v395 = vld [vmem:[%s5 + $0x10] sm:$0xf]
    %v396 = vld [vmem:[%s5 + $0x14] sm:$0xf]
    %v397 = vld [vmem:[%s5 + $0x18] sm:$0xf]
    %v398 = vld [vmem:[%s5 + $0x1c] sm:$0xf]
    %v399 = vld [vmem:[%s5 + $0x20] sm:$0xf]
    %v400 = vld [vmem:[%s5 + $0x24] sm:$0xf]
    %v401 = vld [vmem:[%s5 + $0x28] sm:$0xf]
    %v402 = vld [vmem:[%s5 + $0x2c] sm:$0xf]
    %v403 = vld [vmem:[%s5 + $0x30] sm:$0xf]
    %v404 = vld [vmem:[%s5 + $0x34] sm:$0xf]
    %v405 = vld [vmem:[%s5 + $0x38] sm:$0xf]
    %v406 = vld [vmem:[%s5 + $0x3c] sm:$0xf]
    %v407 = vld [vmem:[%s6] sm:$0x1]
    %v409 = vlaneseq
    %v410 = vshrl.u32 %v409, 7
    %v411 = vsub.s32 0, %v410
    %v412 = vrot.slane %v407, %v411
    %v430 = vunpack.c.l.b16 %v391
    %v431 = vunpack.c.l.b16 %v392
    %v432 = vunpack.c.l.b16 %v393
    %v433 = vunpack.c.l.b16 %v394
    %v434 = vunpack.c.l.b16 %v395
    %v435 = vunpack.c.l.b16 %v396
    %v436 = vunpack.c.l.b16 %v397
    %v437 = vunpack.c.l.b16 %v398
    %v438 = vunpack.c.l.b16 %v399
    %v439 = vunpack.c.l.b16 %v400
    %v440 = vunpack.c.l.b16 %v401
    %v441 = vunpack.c.l.b16 %v402
    %v442 = vunpack.c.l.b16 %v403
    %v443 = vunpack.c.l.b16 %v404
    %v444 = vunpack.c.l.b16 %v405
    %v445 = vunpack.c.l.b16 %v406
    %v446 = vpack.c.b16 %v431, %v430
    %v447 = vpack.c.b16 %v433, %v432
    %v448 = vpack.c.b16 %v435, %v434
    %v449 = vpack.c.b16 %v437, %v436
    %v450 = vpack.c.b16 %v439, %v438
    %v451 = vpack.c.b16 %v441, %v440
    %v452 = vpack.c.b16 %v443, %v442
    %v453 = vpack.c.b16 %v445, %v444
    %462 = vmatprep.subr.bf16.mxu0 0
    %463 = vmatpush1.bf16.msra.mxu0 %v446
    %464 = vmatprep.subr.bf16.mxu0 0
    %465 = vmatpush1.bf16.msra.mxu0 %v447
    %466 = vmatprep.subr.bf16.mxu0 0
    %467 = vmatpush1.bf16.msra.mxu0 %v448
    %468 = vmatprep.subr.bf16.mxu0 0
    %469 = vmatpush1.bf16.msra.mxu0 %v449
    %470 = vmatprep.subr.bf16.mxu0 0
    %471 = vmatpush1.bf16.msra.mxu0 %v450
    %472 = vmatprep.subr.bf16.mxu0 0
    %473 = vmatpush1.bf16.msra.mxu0 %v451
    %474 = vmatprep.subr.bf16.mxu0 0
    %475 = vmatpush1.bf16.msra.mxu0 %v452
    %476 = vmatprep.subr.bf16.mxu0 0
    %477 = vmatpush1.bf16.msra.mxu0 %v453
    %478 = vmatprep.subr.bf16.mxu0 0
    %479 = vmatpush1.bf16.msra.mxu0 0
    %480 = vmatprep.subr.bf16.mxu0 0
    %481 = vmatpush1.bf16.msra.mxu0 0
    %482 = vmatprep.subr.bf16.mxu0 0
    %483 = vmatpush1.bf16.msra.mxu0 0
    %484 = vmatprep.subr.bf16.mxu0 0
    %485 = vmatpush1.bf16.msra.mxu0 0
    %486 = vmatprep.subr.bf16.mxu0 0
    %487 = vmatpush1.bf16.msra.mxu0 0
    %488 = vmatprep.subr.bf16.mxu0 0
    %489 = vmatpush1.bf16.msra.mxu0 0
    %490 = vmatprep.subr.bf16.mxu0 0
    %491 = vmatpush1.bf16.msra.mxu0 0
    %492 = vmatprep.subr.bf16.mxu0 0
    %493 = vmatpush1.bf16.msra.mxu0 0
    %494 = vmatprep.mubr.bf16.mxu0 0
    %495 = vmatmul.mubr.bf16.gmra.mrb[0].mxu0 %v390
    %v496 = vpop.f32.mrb[0].mxu0
    %v497 = vadd.f32 %v412, %v496
    %v498 = vpop.f32.mrb[0].mxu0
    %v499 = vpop.f32.mrb[0].mxu0
    %v500 = vadd.f32 %v412, %v499
    %v501 = vpop.f32.mrb[0].mxu0
    %502 = vdwg.mxu0
    %v503 = vmax.f32 %v497, 0.0
    %v504 = vmax.f32 %v500, 0.0
    %v505 = vpack.c.bf16 %v504, %v503
    %v506 = vld [vmem:[%s7] sm:$0xf]
    %v507 = vld [vmem:[%s7 + $0x4] sm:$0xf]
    %v508 = vld [vmem:[%s7 + $0x8] sm:$0xf]
    %v509 = vld [vmem:[%s7 + $0xc] sm:$0xf]
    %v510 = vld [vmem:[%s7 + $0x10] sm:$0xf]
    %v511 = vld [vmem:[%s7 + $0x14] sm:$0xf]
    %v512 = vld [vmem:[%s7 + $0x18] sm:$0xf]
    %v513 = vld [vmem:[%s7 + $0x1c] sm:$0xf]
    %v514 = vld [vmem:[%s8] sm:$0x1]
    %v516 = vlaneseq
    %v517 = vshrl.u32 %v516, 7
    %v518 = vsub.s32 0, %v517
    %v519 = vrot.slane %v514, %v518
    %v529 = vunpack.c.l.b16 %v506
    %v530 = vunpack.c.l.b16 %v507
    %v531 = vunpack.c.l.b16 %v508
    %v532 = vunpack.c.l.b16 %v509
    %v533 = vunpack.c.l.b16 %v510
    %v534 = vunpack.c.l.b16 %v511
    %v535 = vunpack.c.l.b16 %v512
    %v536 = vunpack.c.l.b16 %v513
    %v537 = vpack.c.b16 %v530, %v529
    %v538 = vpack.c.b16 %v532, %v531
    %v539 = vpack.c.b16 %v534, %v533
    %v540 = vpack.c.b16 %v536, %v535
    %vm545 = vcmask 523264
    %v547 = vsel %vm545, %v505, 0
    %549 = vmatprep.subr.bf16.mxu0 0
    %550 = vmatpush1.bf16.msra.mxu0 %v537
    %551 = vmatprep.subr.bf16.mxu0 0
    %552 = vmatpush1.bf16.msra.mxu0 %v538
    %553 = vmatprep.subr.bf16.mxu0 0
    %554 = vmatpush1.bf16.msra.mxu0 %v539
    %555 = vmatprep.subr.bf16.mxu0 0
    %556 = vmatpush1.bf16.msra.mxu0 %v540
    %557 = vmatprep.subr.bf16.mxu0 0
    %558 = vmatpush1.bf16.msra.mxu0 0
    %559 = vmatprep.subr.bf16.mxu0 0
    %560 = vmatpush1.bf16.msra.mxu0 0
    %561 = vmatprep.subr.bf16.mxu0 0
    %562 = vmatpush1.bf16.msra.mxu0 0
    %563 = vmatprep.subr.bf16.mxu0 0
    %564 = vmatpush1.bf16.msra.mxu0 0
    %565 = vmatprep.subr.bf16.mxu0 0
    %566 = vmatpush1.bf16.msra.mxu0 0
    %567 = vmatprep.subr.bf16.mxu0 0
    %568 = vmatpush1.bf16.msra.mxu0 0
    %569 = vmatprep.subr.bf16.mxu0 0
    %570 = vmatpush1.bf16.msra.mxu0 0
    %571 = vmatprep.subr.bf16.mxu0 0
    %572 = vmatpush1.bf16.msra.mxu0 0
    %573 = vmatprep.subr.bf16.mxu0 0
    %574 = vmatpush1.bf16.msra.mxu0 0
    %575 = vmatprep.subr.bf16.mxu0 0
    %576 = vmatpush1.bf16.msra.mxu0 0
    %577 = vmatprep.subr.bf16.mxu0 0
    %578 = vmatpush1.bf16.msra.mxu0 0
    %579 = vmatprep.subr.bf16.mxu0 0
    %580 = vmatpush1.bf16.msra.mxu0 0
    %581 = vmatprep.mubr.bf16.mxu0 0
    %582 = vmatmul.mubr.bf16.gmra.mrb[0].mxu0 %v547
    %v583 = vpop.f32.mrb[0].mxu0
    %v584 = vadd.f32 %v519, %v583
    %v585 = vpop.f32.mrb[0].mxu0
    %v586 = vpop.f32.mrb[0].mxu0
    %v587 = vadd.f32 %v519, %v586
    %v588 = vpop.f32.mrb[0].mxu0
    %589 = vdwg.mxu0
    %v590 = vxor.u32 %v584, 2147483648
    %v591 = vxor.u32 %v587, 2147483648
    %v592 = vmul.f32 %v590, 1.442695
    %v593 = vpow.pop %v592
    %v594 = vmul.f32 %v591, 1.442695
    %v595 = vpow.pop %v594
    %v596 = vadd.f32 %v593, 1.0
    %v597 = vadd.f32 %v595, 1.0
    %v598 = vrcp.pop %v596
    %v599 = vmul.f32 1.0, %v598
    %v600 = vrcp.pop %v597
    %v601 = vmul.f32 1.0, %v600
    %vm602 = vcmask 39936
    %603 = vst.msk [vmem:[%s9] sm:$0xff] %vm602, %v599
    %604 = vst.msk [vmem:[%s9 + $0x8] sm:$0xff] %vm602, %v601
    // Predicated region
    $region42: #{_forward.1} parent=1 // pred_check
      _
    $region43: #{_forward.1} parent=1 // pred_check_branch
      %606 = sbr.rel (0) target = $region45
    $region44: #{_forward.1} parent=1 // pred_region
      _
    $region45: #{_forward.1} parent=1 // pred_fallthru
      _
    // Predicated region
    $region46: #{_forward.1} parent=1 // pred_check
      _
    $region47: #{_forward.1} parent=1 // pred_check_branch
      %608 = sbr.rel (0) target = $region49
    $region48: #{_forward.1} parent=1 // pred_region
      _
    $region49: #{_forward.1} parent=1 // pred_fallthru
      _
    %609 = vsyncpa [#allocation3], 1

</llo_original>
